<compile_context>
chip_gen: v7x
topology: tpu7x:2x2x1
jax: 0.10.0
libtpu: 0.0.40
codegen_flags: <defaults>
</compile_context>

<pallas_src>
import functools

import jax
import jax.numpy as jnp
from jax.experimental import pallas as pl
from jax.experimental.pallas import tpu as pltpu

HIDDEN = 64
INPUT_SIZE = 31
OUTPUT_SIZE = 19

# Layer dims of the nn.Sequential: Linear(31,64) ... Linear(64,19)
LAYER_DIMS = [
    (INPUT_SIZE, HIDDEN),
    (HIDDEN, HIDDEN * 2),
    (HIDDEN * 2, HIDDEN * 4),
    (HIDDEN * 4, HIDDEN * 4),
    (HIDDEN * 4, HIDDEN * 2),
    (HIDDEN * 2, HIDDEN),
    (HIDDEN, OUTPUT_SIZE),
]
NUM_LAYERS = len(LAYER_DIMS)

IN_PAD = 32                                     # 31 -> 32 (== full array dim)
N_PADS = [128, 128, 256, 256, 128, 128, 128]    # per-layer output width (128-lane multiples)
K_PADS = [IN_PAD] + N_PADS[:-1]                 # per-layer input width (chained)
OUT_PAD = N_PADS[-1]                            # 19 -> 128 (single lane group)


def _round_up(x, m):
    return ((x + m - 1) // m) * m


def _penalized_tanh(x):
    # torch.where(x > 0, tanh(x), 0.25 * tanh(x)); 0.25*t is exact in bf16 too.
    t = jnp.tanh(x)
    return jnp.where(x > 0, t, 0.25 * t)


def _default_act_dtype():
    """bf16 elementwise path only on chips with bf16 VPU/EUP (v6e / v7x)."""
    try:
        kind = jax.devices()[0].device_kind.lower()
    except Exception:  # pragma: no cover - defensive
        return jnp.float32
    return jnp.bfloat16 if ("v6" in kind or "v7" in kind) else jnp.float32


def pitch_dnn_kernel(x_ref, *refs, act_dtype):
    # x_ref        : [tile_b, IN_PAD]            f32 (zero padded beyond INPUT_SIZE)
    # refs[0:7]    : per-layer weights [Kp, Np]  bf16 ([in, out] layout, zero padded)
    # refs[7:14]   : per-layer biases  [1, Np]   f32  (zero padded)
    # refs[14]     : out_ref [tile_b, OUT_PAD]   f32  (cols >= OUTPUT_SIZE stay zero)
    w_refs = refs[:NUM_LAYERS]
    b_refs = refs[NUM_LAYERS:2 * NUM_LAYERS]
    out_ref = refs[2 * NUM_LAYERS]

    h = x_ref[...].astype(jnp.bfloat16)          # [tile_b, K_PADS[0]]
    for layer in range(NUM_LAYERS):
        acc = jnp.dot(h, w_refs[layer][...],
                      preferred_element_type=jnp.float32)   # f32 accumulation
        acc = acc + b_refs[layer][...]                        # f32 bias add
        if layer < NUM_LAYERS - 1:
            if act_dtype == jnp.bfloat16:
                # bf16 tanh/select (v6e/v7x): halves EUP work, feeds next MXU directly
                h = _penalized_tanh(acc.astype(jnp.bfloat16))
            else:
                # f32 tanh/select (v5e has no bf16 VPU/EUP), cast for next matmul
                h = _penalized_tanh(acc).astype(jnp.bfloat16)
        else:
            out_ref[...] = acc


def pitch_dnn_forward(x, w_list, b_list, *, tile_b=512, act_dtype=None):
    """x: [B, INPUT_SIZE] f32.  w_list[i]: [K_PADS[i], N_PADS[i]] bf16.
    b_list[i]: [1, N_PADS[i]] f32.  Returns [B, OUTPUT_SIZE] f32."""
    if act_dtype is None:
        act_dtype = _default_act_dtype()

    batch = x.shape[0]
    b8 = _round_up(batch, 8)
    tile_b = min(tile_b, b8)
    # For mid/large batches make sure there are >= 2 grid steps so the
    # "parallel" batch axis can be sharded across v7x's two TensorCores.
    if b8 > 16 and (b8 + tile_b - 1) // tile_b < 2:
        tile_b = _round_up((b8 + 1) // 2, 8)
    b_pad = _round_up(b8, tile_b)

    # Minimal zero padding: batch to tile boundary, features 31 -> 32.
    x_pad = jnp.zeros((b_pad, IN_PAD), jnp.float32)
    x_pad = x_pad.at[:batch, :INPUT_SIZE].set(x.astype(jnp.float32))

    grid = (b_pad // tile_b,)

    flops = 2 * b_pad * sum(k * n for k, n in zip(K_PADS, N_PADS))
    cost = pl.CostEstimate(
        flops=flops,
        transcendentals=b_pad * sum(N_PADS[:-1]),
        bytes_accessed=(x_pad.size * 4
                        + sum(int(w.size) * 2 for w in w_list)
                        + sum(int(b.size) * 4 for b in b_list)
                        + b_pad * OUT_PAD * 4),
    )

    in_specs = [pl.BlockSpec((tile_b, IN_PAD), lambda i: (i, 0))]
    # Per-layer weights / biases: constant block index -> fetched once, VMEM resident.
    for layer in range(NUM_LAYERS):
        in_specs.append(
            pl.BlockSpec((K_PADS[layer], N_PADS[layer]), lambda i: (0, 0)))
    for layer in range(NUM_LAYERS):
        in_specs.append(pl.BlockSpec((1, N_PADS[layer]), lambda i: (0, 0)))

    out = pl.pallas_call(
        functools.partial(pitch_dnn_kernel, act_dtype=act_dtype),
        out_shape=jax.ShapeDtypeStruct((b_pad, OUT_PAD), jnp.float32),
        grid_spec=pltpu.PrefetchScalarGridSpec(
            num_scalar_prefetch=0,
            grid=grid,
            in_specs=in_specs,
            out_specs=pl.BlockSpec((tile_b, OUT_PAD), lambda i: (i, 0)),
        ),
        compiler_params=pltpu.CompilerParams(
            dimension_semantics=("parallel",)),
        cost_estimate=cost,
    )(x_pad, *w_list, *b_list)

    return out[:batch, :OUTPUT_SIZE]


def init_params(key):
    """Deterministic init mimicking nn.Linear default (uniform +/- 1/sqrt(fan_in)).
    Weights returned in [in, out] layout; biases as [1, out]."""
    params = []
    for (fan_in, fan_out) in LAYER_DIMS:
        key, kw, kb = jax.random.split(key, 3)
        bound = 1.0 / jnp.sqrt(float(fan_in))
        w = jax.random.uniform(kw, (fan_in, fan_out), jnp.float32, -bound, bound)
        b = jax.random.uniform(kb, (1, fan_out), jnp.float32, -bound, bound)
        params.append((w, b))
    return params


def pack_params(params):
    """Pack per-layer (w [in,out] f32, b [1,out] f32) into per-layer zero-padded
    arrays: w -> [K_PADS[i], N_PADS[i]] bf16, b -> [1, N_PADS[i]] f32."""
    w_list, b_list = [], []
    for layer, (w, b) in enumerate(params):
        fan_in, fan_out = w.shape
        wp = jnp.zeros((K_PADS[layer], N_PADS[layer]), jnp.bfloat16)
        wp = wp.at[:fan_in, :fan_out].set(w.astype(jnp.bfloat16))
        bp = jnp.zeros((1, N_PADS[layer]), jnp.float32)
        bp = bp.at[0, :fan_out].set(b.reshape(-1).astype(jnp.float32))
        w_list.append(wp)
        b_list.append(bp)
    return w_list, b_list


def reference_forward(x, params, act_dtype):
    """Plain JAX reference mirroring the kernel arithmetic (bf16 matmul inputs,
    f32 accumulation / bias add, activation in act_dtype)."""
    h = x.astype(jnp.bfloat16)
    out = None
    for i, (w, b) in enumerate(params):
        acc = jnp.dot(h, w.astype(jnp.bfloat16),
                      preferred_element_type=jnp.float32) + b.astype(jnp.float32)
        if i < NUM_LAYERS - 1:
            if act_dtype == jnp.bfloat16:
                h = _penalized_tanh(acc.astype(jnp.bfloat16))
            else:
                h = _penalized_tanh(acc).astype(jnp.bfloat16)
        else:
            out = acc
    return out


if __name__ == "__main__":
    key = jax.random.PRNGKey(0)
    key, kx = jax.random.split(key)

    batch = 8
    x = jax.random.normal(kx, (batch, INPUT_SIZE), jnp.float32)
    params = init_params(key)
    w_list, b_list = pack_params(params)

    act_dtype = _default_act_dtype()

    out = pitch_dnn_forward(x, w_list, b_list, act_dtype=act_dtype)
    out = jax.block_until_ready(out)

    ref = reference_forward(x, params, act_dtype)
    assert out.shape == (batch, OUTPUT_SIZE), out.shape
    assert jnp.allclose(out, ref, atol=2e-2, rtol=2e-2), (
        float(jnp.max(jnp.abs(out - ref)))
    )

    print("KERNEL_OK")
</pallas_src>

<mosaic_0001>
module attributes {stable_mosaic.version = 11 : i64} {
  func.func @pitch_dnn_kernel(%arg0: i32, %arg1: memref<8x32xf32, #tpu.memory_space<vmem>>, %arg2: memref<32x128xbf16, #tpu.memory_space<vmem>>, %arg3: memref<128x128xbf16, #tpu.memory_space<vmem>>, %arg4: memref<128x256xbf16, #tpu.memory_space<vmem>>, %arg5: memref<256x256xbf16, #tpu.memory_space<vmem>>, %arg6: memref<256x128xbf16, #tpu.memory_space<vmem>>, %arg7: memref<128x128xbf16, #tpu.memory_space<vmem>>, %arg8: memref<128x128xbf16, #tpu.memory_space<vmem>>, %arg9: memref<1x128xf32, #tpu.memory_space<vmem>>, %arg10: memref<1x128xf32, #tpu.memory_space<vmem>>, %arg11: memref<1x256xf32, #tpu.memory_space<vmem>>, %arg12: memref<1x256xf32, #tpu.memory_space<vmem>>, %arg13: memref<1x128xf32, #tpu.memory_space<vmem>>, %arg14: memref<1x128xf32, #tpu.memory_space<vmem>>, %arg15: memref<1x128xf32, #tpu.memory_space<vmem>>, %arg16: memref<8x128xf32, #tpu.memory_space<vmem>>) attributes {dimension_semantics = [#tpu.dimension_semantics<parallel>], iteration_bounds = array<i64: 1>, scalar_prefetch = 0 : i64, scratch_operands = 0 : i64, tpu.core_type = #tpu.core_type<tc>, window_params = [{transform_indices = @transform_0, window_bounds = array<i64: 8, 32>}, {pipeline_mode = #tpu.pipeline_mode<synchronous>, transform_indices = @transform_1, window_bounds = array<i64: 32, 128>}, {pipeline_mode = #tpu.pipeline_mode<synchronous>, transform_indices = @transform_2, window_bounds = array<i64: 128, 128>}, {pipeline_mode = #tpu.pipeline_mode<synchronous>, transform_indices = @transform_3, window_bounds = array<i64: 128, 256>}, {pipeline_mode = #tpu.pipeline_mode<synchronous>, transform_indices = @transform_4, window_bounds = array<i64: 256, 256>}, {pipeline_mode = #tpu.pipeline_mode<synchronous>, transform_indices = @transform_5, window_bounds = array<i64: 256, 128>}, {pipeline_mode = #tpu.pipeline_mode<synchronous>, transform_indices = @transform_6, window_bounds = array<i64: 128, 128>}, {pipeline_mode = #tpu.pipeline_mode<synchronous>, transform_indices = @transform_7, window_bounds = array<i64: 128, 128>}, {pipeline_mode = #tpu.pipeline_mode<synchronous>, transform_indices = @transform_8, window_bounds = array<i64: 1, 128>}, {pipeline_mode = #tpu.pipeline_mode<synchronous>, transform_indices = @transform_9, window_bounds = array<i64: 1, 128>}, {pipeline_mode = #tpu.pipeline_mode<synchronous>, transform_indices = @transform_10, window_bounds = array<i64: 1, 256>}, {pipeline_mode = #tpu.pipeline_mode<synchronous>, transform_indices = @transform_11, window_bounds = array<i64: 1, 256>}, {pipeline_mode = #tpu.pipeline_mode<synchronous>, transform_indices = @transform_12, window_bounds = array<i64: 1, 128>}, {pipeline_mode = #tpu.pipeline_mode<synchronous>, transform_indices = @transform_13, window_bounds = array<i64: 1, 128>}, {pipeline_mode = #tpu.pipeline_mode<synchronous>, transform_indices = @transform_14, window_bounds = array<i64: 1, 128>}, {transform_indices = @transform_15, window_bounds = array<i64: 8, 128>}]} {
    %c0 = arith.constant 0 : index
    %c0_0 = arith.constant 0 : index
    %0 = vector.load %arg1[%c0, %c0_0] : memref<8x32xf32, #tpu.memory_space<vmem>>, vector<8x32xf32>
    %1 = arith.truncf %0 : vector<8x32xf32> to vector<8x32xbf16>
    %c0_1 = arith.constant 0 : index
    %c0_2 = arith.constant 0 : index
    %2 = vector.load %arg2[%c0_1, %c0_2] : memref<32x128xbf16, #tpu.memory_space<vmem>>, vector<32x128xbf16>
    %cst = arith.constant dense<0.000000e+00> : vector<8x128xf32>
    %3 = tpu.matmul %1, %2, %cst {dimension_numbers = #tpu.dot_dimension_numbers<[1], [0], [0], [1], [0, 0, 1, 1], [], []>} : vector<8x32xbf16>, vector<32x128xbf16>, vector<8x128xf32> -> vector<8x128xf32>
    %c0_3 = arith.constant 0 : index
    %c0_4 = arith.constant 0 : index
    %4 = vector.load %arg9[%c0_3, %c0_4] : memref<1x128xf32, #tpu.memory_space<vmem>>, vector<1x128xf32>
    %5 = vector.broadcast %4 : vector<1x128xf32> to vector<8x128xf32>
    %6 = arith.addf %3, %5 : vector<8x128xf32>
    %7 = math.tanh %6 : vector<8x128xf32>
    %cst_5 = arith.constant 0.000000e+00 : f32
    %8 = vector.broadcast %cst_5 : f32 to vector<8x128xf32>
    %9 = arith.cmpf ogt, %6, %8 : vector<8x128xf32>
    %cst_6 = arith.constant 2.500000e-01 : f32
    %10 = vector.broadcast %cst_6 : f32 to vector<8x128xf32>
    %11 = arith.mulf %10, %7 : vector<8x128xf32>
    %12 = arith.select %9, %7, %11 : vector<8x128xi1>, vector<8x128xf32>
    %13 = arith.truncf %12 : vector<8x128xf32> to vector<8x128xbf16>
    %c0_7 = arith.constant 0 : index
    %c0_8 = arith.constant 0 : index
    %14 = vector.load %arg3[%c0_7, %c0_8] : memref<128x128xbf16, #tpu.memory_space<vmem>>, vector<128x128xbf16>
    %cst_9 = arith.constant dense<0.000000e+00> : vector<8x128xf32>
    %15 = tpu.matmul %13, %14, %cst_9 {dimension_numbers = #tpu.dot_dimension_numbers<[1], [0], [0], [1], [0, 0, 1, 1], [], []>} : vector<8x128xbf16>, vector<128x128xbf16>, vector<8x128xf32> -> vector<8x128xf32>
    %c0_10 = arith.constant 0 : index
    %c0_11 = arith.constant 0 : index
    %16 = vector.load %arg10[%c0_10, %c0_11] : memref<1x128xf32, #tpu.memory_space<vmem>>, vector<1x128xf32>
    %17 = vector.broadcast %16 : vector<1x128xf32> to vector<8x128xf32>
    %18 = arith.addf %15, %17 : vector<8x128xf32>
    %19 = math.tanh %18 : vector<8x128xf32>
    %cst_12 = arith.constant 0.000000e+00 : f32
    %20 = vector.broadcast %cst_12 : f32 to vector<8x128xf32>
    %21 = arith.cmpf ogt, %18, %20 : vector<8x128xf32>
    %cst_13 = arith.constant 2.500000e-01 : f32
    %22 = vector.broadcast %cst_13 : f32 to vector<8x128xf32>
    %23 = arith.mulf %22, %19 : vector<8x128xf32>
    %24 = arith.select %21, %19, %23 : vector<8x128xi1>, vector<8x128xf32>
    %25 = arith.truncf %24 : vector<8x128xf32> to vector<8x128xbf16>
    %c0_14 = arith.constant 0 : index
    %c0_15 = arith.constant 0 : index
    %26 = vector.load %arg4[%c0_14, %c0_15] : memref<128x256xbf16, #tpu.memory_space<vmem>>, vector<128x256xbf16>
    %cst_16 = arith.constant dense<0.000000e+00> : vector<8x256xf32>
    %27 = tpu.matmul %25, %26, %cst_16 {dimension_numbers = #tpu.dot_dimension_numbers<[1], [0], [0], [1], [0, 0, 1, 1], [], []>} : vector<8x128xbf16>, vector<128x256xbf16>, vector<8x256xf32> -> vector<8x256xf32>
    %c0_17 = arith.constant 0 : index
    %c0_18 = arith.constant 0 : index
    %28 = vector.load %arg11[%c0_17, %c0_18] : memref<1x256xf32, #tpu.memory_space<vmem>>, vector<1x256xf32>
    %29 = vector.broadcast %28 : vector<1x256xf32> to vector<8x256xf32>
    %30 = arith.addf %27, %29 : vector<8x256xf32>
    %31 = math.tanh %30 : vector<8x256xf32>
    %cst_19 = arith.constant 0.000000e+00 : f32
    %32 = vector.broadcast %cst_19 : f32 to vector<8x256xf32>
    %33 = arith.cmpf ogt, %30, %32 : vector<8x256xf32>
    %cst_20 = arith.constant 2.500000e-01 : f32
    %34 = vector.broadcast %cst_20 : f32 to vector<8x256xf32>
    %35 = arith.mulf %34, %31 : vector<8x256xf32>
    %36 = arith.select %33, %31, %35 : vector<8x256xi1>, vector<8x256xf32>
    %37 = arith.truncf %36 : vector<8x256xf32> to vector<8x256xbf16>
    %c0_21 = arith.constant 0 : index
    %c0_22 = arith.constant 0 : index
    %38 = vector.load %arg5[%c0_21, %c0_22] : memref<256x256xbf16, #tpu.memory_space<vmem>>, vector<256x256xbf16>
    %cst_23 = arith.constant dense<0.000000e+00> : vector<8x256xf32>
    %39 = tpu.matmul %37, %38, %cst_23 {dimension_numbers = #tpu.dot_dimension_numbers<[1], [0], [0], [1], [0, 0, 1, 1], [], []>} : vector<8x256xbf16>, vector<256x256xbf16>, vector<8x256xf32> -> vector<8x256xf32>
    %c0_24 = arith.constant 0 : index
    %c0_25 = arith.constant 0 : index
    %40 = vector.load %arg12[%c0_24, %c0_25] : memref<1x256xf32, #tpu.memory_space<vmem>>, vector<1x256xf32>
    %41 = vector.broadcast %40 : vector<1x256xf32> to vector<8x256xf32>
    %42 = arith.addf %39, %41 : vector<8x256xf32>
    %43 = math.tanh %42 : vector<8x256xf32>
    %cst_26 = arith.constant 0.000000e+00 : f32
    %44 = vector.broadcast %cst_26 : f32 to vector<8x256xf32>
    %45 = arith.cmpf ogt, %42, %44 : vector<8x256xf32>
    %cst_27 = arith.constant 2.500000e-01 : f32
    %46 = vector.broadcast %cst_27 : f32 to vector<8x256xf32>
    %47 = arith.mulf %46, %43 : vector<8x256xf32>
    %48 = arith.select %45, %43, %47 : vector<8x256xi1>, vector<8x256xf32>
    %49 = arith.truncf %48 : vector<8x256xf32> to vector<8x256xbf16>
    %c0_28 = arith.constant 0 : index
    %c0_29 = arith.constant 0 : index
    %50 = vector.load %arg6[%c0_28, %c0_29] : memref<256x128xbf16, #tpu.memory_space<vmem>>, vector<256x128xbf16>
    %cst_30 = arith.constant dense<0.000000e+00> : vector<8x128xf32>
    %51 = tpu.matmul %49, %50, %cst_30 {dimension_numbers = #tpu.dot_dimension_numbers<[1], [0], [0], [1], [0, 0, 1, 1], [], []>} : vector<8x256xbf16>, vector<256x128xbf16>, vector<8x128xf32> -> vector<8x128xf32>
    %c0_31 = arith.constant 0 : index
    %c0_32 = arith.constant 0 : index
    %52 = vector.load %arg13[%c0_31, %c0_32] : memref<1x128xf32, #tpu.memory_space<vmem>>, vector<1x128xf32>
    %53 = vector.broadcast %52 : vector<1x128xf32> to vector<8x128xf32>
    %54 = arith.addf %51, %53 : vector<8x128xf32>
    %55 = math.tanh %54 : vector<8x128xf32>
    %cst_33 = arith.constant 0.000000e+00 : f32
    %56 = vector.broadcast %cst_33 : f32 to vector<8x128xf32>
    %57 = arith.cmpf ogt, %54, %56 : vector<8x128xf32>
    %cst_34 = arith.constant 2.500000e-01 : f32
    %58 = vector.broadcast %cst_34 : f32 to vector<8x128xf32>
    %59 = arith.mulf %58, %55 : vector<8x128xf32>
    %60 = arith.select %57, %55, %59 : vector<8x128xi1>, vector<8x128xf32>
    %61 = arith.truncf %60 : vector<8x128xf32> to vector<8x128xbf16>
    %c0_35 = arith.constant 0 : index
    %c0_36 = arith.constant 0 : index
    %62 = vector.load %arg7[%c0_35, %c0_36] : memref<128x128xbf16, #tpu.memory_space<vmem>>, vector<128x128xbf16>
    %cst_37 = arith.constant dense<0.000000e+00> : vector<8x128xf32>
    %63 = tpu.matmul %61, %62, %cst_37 {dimension_numbers = #tpu.dot_dimension_numbers<[1], [0], [0], [1], [0, 0, 1, 1], [], []>} : vector<8x128xbf16>, vector<128x128xbf16>, vector<8x128xf32> -> vector<8x128xf32>
    %c0_38 = arith.constant 0 : index
    %c0_39 = arith.constant 0 : index
    %64 = vector.load %arg14[%c0_38, %c0_39] : memref<1x128xf32, #tpu.memory_space<vmem>>, vector<1x128xf32>
    %65 = vector.broadcast %64 : vector<1x128xf32> to vector<8x128xf32>
    %66 = arith.addf %63, %65 : vector<8x128xf32>
    %67 = math.tanh %66 : vector<8x128xf32>
    %cst_40 = arith.constant 0.000000e+00 : f32
    %68 = vector.broadcast %cst_40 : f32 to vector<8x128xf32>
    %69 = arith.cmpf ogt, %66, %68 : vector<8x128xf32>
    %cst_41 = arith.constant 2.500000e-01 : f32
    %70 = vector.broadcast %cst_41 : f32 to vector<8x128xf32>
    %71 = arith.mulf %70, %67 : vector<8x128xf32>
    %72 = arith.select %69, %67, %71 : vector<8x128xi1>, vector<8x128xf32>
    %73 = arith.truncf %72 : vector<8x128xf32> to vector<8x128xbf16>
    %c0_42 = arith.constant 0 : index
    %c0_43 = arith.constant 0 : index
    %74 = vector.load %arg8[%c0_42, %c0_43] : memref<128x128xbf16, #tpu.memory_space<vmem>>, vector<128x128xbf16>
    %cst_44 = arith.constant dense<0.000000e+00> : vector<8x128xf32>
    %75 = tpu.matmul %73, %74, %cst_44 {dimension_numbers = #tpu.dot_dimension_numbers<[1], [0], [0], [1], [0, 0, 1, 1], [], []>} : vector<8x128xbf16>, vector<128x128xbf16>, vector<8x128xf32> -> vector<8x128xf32>
    %c0_45 = arith.constant 0 : index
    %c0_46 = arith.constant 0 : index
    %76 = vector.load %arg15[%c0_45, %c0_46] : memref<1x128xf32, #tpu.memory_space<vmem>>, vector<1x128xf32>
    %77 = vector.broadcast %76 : vector<1x128xf32> to vector<8x128xf32>
    %78 = arith.addf %75, %77 : vector<8x128xf32>
    %c0_47 = arith.constant 0 : index
    %c0_48 = arith.constant 0 : index
    %79 = vector.load %arg16[%c0_47, %c0_48] : memref<8x128xf32, #tpu.memory_space<vmem>>, vector<8x128xf32>
    tpu.vector_store %arg16[%c0_47, %c0_48], %78 {strides = array<i32>} : memref<8x128xf32, #tpu.memory_space<vmem>>, vector<8x128xf32>,
    return
  }
  func.func @transform_0(%arg0: i32) -> (i32, i32) {
    %c0_i32 = arith.constant 0 : i32
    %c0_i32_0 = arith.constant 0 : i32
    return %arg0, %c0_i32 : i32, i32
  }
  func.func @transform_1(%arg0: i32) -> (i32, i32) {
    %c0_i32 = arith.constant 0 : i32
    %c0_i32_0 = arith.constant 0 : i32
    %c0_i32_1 = arith.constant 0 : i32
    return %c0_i32, %c0_i32_0 : i32, i32
  }
  func.func @transform_2(%arg0: i32) -> (i32, i32) {
    %c0_i32 = arith.constant 0 : i32
    %c0_i32_0 = arith.constant 0 : i32
    %c0_i32_1 = arith.constant 0 : i32
    return %c0_i32, %c0_i32_0 : i32, i32
  }
  func.func @transform_3(%arg0: i32) -> (i32, i32) {
    %c0_i32 = arith.constant 0 : i32
    %c0_i32_0 = arith.constant 0 : i32
    %c0_i32_1 = arith.constant 0 : i32
    return %c0_i32, %c0_i32_0 : i32, i32
  }
  func.func @transform_4(%arg0: i32) -> (i32, i32) {
    %c0_i32 = arith.constant 0 : i32
    %c0_i32_0 = arith.constant 0 : i32
    %c0_i32_1 = arith.constant 0 : i32
    return %c0_i32, %c0_i32_0 : i32, i32
  }
  func.func @transform_5(%arg0: i32) -> (i32, i32) {
    %c0_i32 = arith.constant 0 : i32
    %c0_i32_0 = arith.constant 0 : i32
    %c0_i32_1 = arith.constant 0 : i32
    return %c0_i32, %c0_i32_0 : i32, i32
  }
  func.func @transform_6(%arg0: i32) -> (i32, i32) {
    %c0_i32 = arith.constant 0 : i32
    %c0_i32_0 = arith.constant 0 : i32
    %c0_i32_1 = arith.constant 0 : i32
    return %c0_i32, %c0_i32_0 : i32, i32
  }
  func.func @transform_7(%arg0: i32) -> (i32, i32) {
    %c0_i32 = arith.constant 0 : i32
    %c0_i32_0 = arith.constant 0 : i32
    %c0_i32_1 = arith.constant 0 : i32
    return %c0_i32, %c0_i32_0 : i32, i32
  }
  func.func @transform_8(%arg0: i32) -> (i32, i32) {
    %c0_i32 = arith.constant 0 : i32
    %c0_i32_0 = arith.constant 0 : i32
    %c0_i32_1 = arith.constant 0 : i32
    return %c0_i32, %c0_i32_0 : i32, i32
  }
  func.func @transform_9(%arg0: i32) -> (i32, i32) {
    %c0_i32 = arith.constant 0 : i32
    %c0_i32_0 = arith.constant 0 : i32
    %c0_i32_1 = arith.constant 0 : i32
    return %c0_i32, %c0_i32_0 : i32, i32
  }
  func.func @transform_10(%arg0: i32) -> (i32, i32) {
    %c0_i32 = arith.constant 0 : i32
    %c0_i32_0 = arith.constant 0 : i32
    %c0_i32_1 = arith.constant 0 : i32
    return %c0_i32, %c0_i32_0 : i32, i32
  }
  func.func @transform_11(%arg0: i32) -> (i32, i32) {
    %c0_i32 = arith.constant 0 : i32
    %c0_i32_0 = arith.constant 0 : i32
    %c0_i32_1 = arith.constant 0 : i32
    return %c0_i32, %c0_i32_0 : i32, i32
  }
  func.func @transform_12(%arg0: i32) -> (i32, i32) {
    %c0_i32 = arith.constant 0 : i32
    %c0_i32_0 = arith.constant 0 : i32
    %c0_i32_1 = arith.constant 0 : i32
    return %c0_i32, %c0_i32_0 : i32, i32
  }
  func.func @transform_13(%arg0: i32) -> (i32, i32) {
    %c0_i32 = arith.constant 0 : i32
    %c0_i32_0 = arith.constant 0 : i32
    %c0_i32_1 = arith.constant 0 : i32
    return %c0_i32, %c0_i32_0 : i32, i32
  }
  func.func @transform_14(%arg0: i32) -> (i32, i32) {
    %c0_i32 = arith.constant 0 : i32
    %c0_i32_0 = arith.constant 0 : i32
    %c0_i32_1 = arith.constant 0 : i32
    return %c0_i32, %c0_i32_0 : i32, i32
  }
  func.func @transform_15(%arg0: i32) -> (i32, i32) {
    %c0_i32 = arith.constant 0 : i32
    %c0_i32_0 = arith.constant 0 : i32
    return %arg0, %c0_i32 : i32, i32
  }
}

</mosaic_0001>

<llo_original>
// kernel: tpu_custom_call.1
$region0: #{tpu_custom_call.1}
  #allocation0 [shape = 'u32[]', space=smem, size = 0x4, offset = 0x4, fixed_abs, tag = 'smem constant byte address 0x4 - core index']
  #allocation1 [shape = 'u32[144,128]{1,0:T(1,128)}', space=vmem, size = 0x12000, scoped, tag = 'internal scratch']
  %s0 = inlined_call_operand.hbm [shape: f32[8,32], index: 0, kind: input, shape index: {}]
  %s1 = inlined_call_operand.hbm [shape: bf16[32,128], index: 1, kind: input, shape index: {}]
  %s2 = inlined_call_operand.hbm [shape: bf16[128,128], index: 2, kind: input, shape index: {}]
  %s3 = inlined_call_operand.hbm [shape: bf16[128,256], index: 3, kind: input, shape index: {}]
  %s4 = inlined_call_operand.hbm [shape: bf16[256,256], index: 4, kind: input, shape index: {}]
  %s5 = inlined_call_operand.hbm [shape: bf16[256,128], index: 5, kind: input, shape index: {}]
  %s6 = inlined_call_operand.hbm [shape: bf16[128,128], index: 6, kind: input, shape index: {}]
  %s7 = inlined_call_operand.hbm [shape: bf16[128,128], index: 7, kind: input, shape index: {}]
  %s8 = inlined_call_operand.vmem [shape: f32[1,128], index: 8, kind: input, shape index: {}]
  %s9 = inlined_call_operand.vmem [shape: f32[1,128], index: 9, kind: input, shape index: {}]
  %s10 = inlined_call_operand.vmem [shape: f32[1,256], index: 10, kind: input, shape index: {}]
  %s11 = inlined_call_operand.vmem [shape: f32[1,256], index: 11, kind: input, shape index: {}]
  %s12 = inlined_call_operand.vmem [shape: f32[1,128], index: 12, kind: input, shape index: {}]
  %s13 = inlined_call_operand.vmem [shape: f32[1,128], index: 13, kind: input, shape index: {}]
  %s14 = inlined_call_operand.vmem [shape: f32[1,128], index: 14, kind: input, shape index: {}]
  %s15 = inlined_call_operand.hbm [shape: f32[8,128], index: 15, kind: output, shape index: {}]
  %s16 = sld [smem:[#allocation0]]
  $region102: #{tpu_custom_call.1} parent=0
    _
  %s18 = ssub.s32 1, %s16
  %s19 = scalar_select 0, %s18, %s16
  $region1: #{tpu_custom_call.1} parent=0
    #allocation2 [shape = 'u8[4096]{0}', space=vmem, size = 0x1000, scoped, tag = 'input window, operand 0, single buffered']
    #allocation3 [shape = 's32[1]{0}', space=sflag, size = 0x4, scoped, tag = 'scoped memory for tpu_custom_call.1']
    #allocation4 [shape = 's32[1]{0}', space=sflag, size = 0x4, scoped, tag = 'scoped memory for tpu_custom_call.1']
    #allocation5 [shape = 'u8[8192]{0}', space=vmem, size = 0x2000, scoped, tag = 'input window, operand 1, single buffered']
    #allocation6 [shape = 's32[1]{0}', space=sflag, size = 0x4, scoped, tag = 'scoped memory for tpu_custom_call.1']
    #allocation7 [shape = 'u8[32768]{0}', space=vmem, size = 0x8000, scoped, tag = 'input window, operand 2, single buffered']
    #allocation8 [shape = 'u8[65536]{0}', space=vmem, size = 0x10000, scoped, tag = 'input window, operand 3, single buffered']
    #allocation9 [shape = 's32[1]{0}', space=sflag, size = 0x4, scoped, tag = 'scoped memory for tpu_custom_call.1']
    #allocation10 [shape = 'u8[131072]{0}', space=vmem, size = 0x20000, scoped, tag = 'input window, operand 4, single buffered']
    #allocation11 [shape = 'u8[65536]{0}', space=vmem, size = 0x10000, scoped, tag = 'input window, operand 5, single buffered']
    #allocation12 [shape = 's32[1]{0}', space=sflag, size = 0x4, scoped, tag = 'scoped memory for tpu_custom_call.1']
    #allocation13 [shape = 'u8[32768]{0}', space=vmem, size = 0x8000, scoped, tag = 'input window, operand 6, single buffered']
    #allocation14 [shape = 'u8[32768]{0}', space=vmem, size = 0x8000, scoped, tag = 'input window, operand 7, single buffered']
    #allocation15 [shape = 's32[1]{0}', space=sflag, size = 0x4, scoped, tag = 'scoped memory for tpu_custom_call.1']
    #allocation16 [shape = 'u8[4096]{0}', space=vmem, size = 0x1000, scoped, tag = 'output window, operand 0, single buffered']
    %20 = vsyncpa [#allocation3], 0
    %21 = vsyncpa [#allocation6], 0
    %22 = vsyncpa [#allocation9], 0
    %23 = vsyncpa [#allocation12], 0
    %24 = vsyncpa [#allocation15], 0
    %25 = vsyncpa [#allocation4], 0
    // Predicated region
    $region2: #{tpu_custom_call.1} parent=1 // pred_check
      _
    $region3: #{tpu_custom_call.1} parent=1 // pred_check_branch
      %27 = sbr.rel (0) target = $region5
    $region4: #{tpu_custom_call.1} parent=1 // pred_region
      %s29 = ssub.s32 128, 128
      %30 = vsyncadd [#allocation3], %s29
      %s32 = sshll.u32 [#allocation2], 4
      %s33 = int_to_ptr.vmem [resolvable:$true] %s32
      %35 = dma.hbm_to_vmem [thread:$0]  %s0, 128, %s33, [#allocation3]
    $region5: #{tpu_custom_call.1} parent=1 // pred_fallthru
      _
    // Predicated region
    $region6: #{tpu_custom_call.1} parent=1 // pred_check
      _
    $region7: #{tpu_custom_call.1} parent=1 // pred_check_branch
      %37 = sbr.rel (0) target = $region9
    $region8: #{tpu_custom_call.1} parent=1 // pred_region
      %s39 = ssub.s32 256, 256
      %40 = vsyncadd [#allocation6], %s39
      %s41 = sshll.u32 [#allocation5], 4
      %s42 = int_to_ptr.vmem [resolvable:$true] %s41
      %47 = dma.hbm_to_vmem [thread:$0]  %s1, 256, %s42, [#allocation6], 64, 64, 4
    $region9: #{tpu_custom_call.1} parent=1 // pred_fallthru
      _
    // Predicated region
    $region10: #{tpu_custom_call.1} parent=1 // pred_check
      _
    $region11: #{tpu_custom_call.1} parent=1 // pred_check_branch
      %49 = sbr.rel (0) target = $region13
    $region12: #{tpu_custom_call.1} parent=1 // pred_region
      %s51 = ssub.s32 1024, 1024
      %52 = vsyncadd [#allocation6], %s51
      %s53 = sshll.u32 [#allocation7], 4
      %s54 = int_to_ptr.vmem [resolvable:$true] %s53
      %59 = dma.hbm_to_vmem [thread:$0]  %s2, 1024, %s54, [#allocation6], 64, 64, 4
    $region13: #{tpu_custom_call.1} parent=1 // pred_fallthru
      _
    // Predicated region
    $region14: #{tpu_custom_call.1} parent=1 // pred_check
      _
    $region15: #{tpu_custom_call.1} parent=1 // pred_check_branch
      %61 = sbr.rel (0) target = $region17
    $region16: #{tpu_custom_call.1} parent=1 // pred_region
      %s63 = ssub.s32 2048, 2048
      %64 = vsyncadd [#allocation9], %s63
      %s65 = sshll.u32 [#allocation8], 4
      %s66 = int_to_ptr.vmem [resolvable:$true] %s65
      %71 = dma.hbm_to_vmem [thread:$0]  %s3, 2048, %s66, [#allocation9], 128, 128, 8
    $region17: #{tpu_custom_call.1} parent=1 // pred_fallthru
      _
    // Predicated region
    $region18: #{tpu_custom_call.1} parent=1 // pred_check
      _
    $region19: #{tpu_custom_call.1} parent=1 // pred_check_branch
      %73 = sbr.rel (0) target = $region21
    $region20: #{tpu_custom_call.1} parent=1 // pred_region
      %s75 = ssub.s32 4096, 4096
      %76 = vsyncadd [#allocation9], %s75
      %s77 = sshll.u32 [#allocation10], 4
      %s78 = int_to_ptr.vmem [resolvable:$true] %s77
      %83 = dma.hbm_to_vmem [thread:$0]  %s4, 4096, %s78, [#allocation9], 128, 128, 8
    $region21: #{tpu_custom_call.1} parent=1 // pred_fallthru
      _
    // Predicated region
    $region22: #{tpu_custom_call.1} parent=1 // pred_check
      _
    $region23: #{tpu_custom_call.1} parent=1 // pred_check_branch
      %85 = sbr.rel (0) target = $region25
    $region24: #{tpu_custom_call.1} parent=1 // pred_region
      %s87 = ssub.s32 2048, 2048
      %88 = vsyncadd [#allocation12], %s87
      %s89 = sshll.u32 [#allocation11], 4
      %s90 = int_to_ptr.vmem [resolvable:$true] %s89
      %95 = dma.hbm_to_vmem [thread:$0]  %s5, 2048, %s90, [#allocation12], 64, 64, 4
    $region25: #{tpu_custom_call.1} parent=1 // pred_fallthru
      _
    // Predicated region
    $region26: #{tpu_custom_call.1} parent=1 // pred_check
      _
    $region27: #{tpu_custom_call.1} parent=1 // pred_check_branch
      %97 = sbr.rel (0) target = $region29
    $region28: #{tpu_custom_call.1} parent=1 // pred_region
      %s99 = ssub.s32 1024, 1024
      %100 = vsyncadd [#allocation12], %s99
      %s101 = sshll.u32 [#allocation13], 4
      %s102 = int_to_ptr.vmem [resolvable:$true] %s101
      %107 = dma.hbm_to_vmem [thread:$0]  %s6, 1024, %s102, [#allocation12], 64, 64, 4
    $region29: #{tpu_custom_call.1} parent=1 // pred_fallthru
      _
    // Predicated region
    $region30: #{tpu_custom_call.1} parent=1 // pred_check
      _
    $region31: #{tpu_custom_call.1} parent=1 // pred_check_branch
      %109 = sbr.rel (0) target = $region33
    $region32: #{tpu_custom_call.1} parent=1 // pred_region
      %s111 = ssub.s32 1024, 1024
      %112 = vsyncadd [#allocation15], %s111
      %s113 = sshll.u32 [#allocation14], 4
      %s114 = int_to_ptr.vmem [resolvable:$true] %s113
      %119 = dma.hbm_to_vmem [thread:$0]  %s7, 1024, %s114, [#allocation15], 64, 64, 4
    $region33: #{tpu_custom_call.1} parent=1 // pred_fallthru
      _
    // Predicated region
    $region34: #{tpu_custom_call.1} parent=1 // pred_check
      _
    $region35: #{tpu_custom_call.1} parent=1 // pred_check_branch
      %121 = sbr.rel (0) target = $region37
    $region36: #{tpu_custom_call.1} parent=1 // pred_region
      _
    $region37: #{tpu_custom_call.1} parent=1 // pred_fallthru
      _
    // Predicated region
    $region38: #{tpu_custom_call.1} parent=1 // pred_check
      _
    $region39: #{tpu_custom_call.1} parent=1 // pred_check_branch
      %123 = sbr.rel (0) target = $region41
    $region40: #{tpu_custom_call.1} parent=1 // pred_region
      _
    $region41: #{tpu_custom_call.1} parent=1 // pred_fallthru
      _
    // Predicated region
    $region42: #{tpu_custom_call.1} parent=1 // pred_check
      _
    $region43: #{tpu_custom_call.1} parent=1 // pred_check_branch
      %125 = sbr.rel (0) target = $region45
    $region44: #{tpu_custom_call.1} parent=1 // pred_region
      _
    $region45: #{tpu_custom_call.1} parent=1 // pred_fallthru
      _
    // Predicated region
    $region46: #{tpu_custom_call.1} parent=1 // pred_check
      _
    $region47: #{tpu_custom_call.1} parent=1 // pred_check_branch
      %127 = sbr.rel (0) target = $region49
    $region48: #{tpu_custom_call.1} parent=1 // pred_region
      _
    $region49: #{tpu_custom_call.1} parent=1 // pred_fallthru
      _
    // Predicated region
    $region50: #{tpu_custom_call.1} parent=1 // pred_check
      _
    $region51: #{tpu_custom_call.1} parent=1 // pred_check_branch
      %129 = sbr.rel (0) target = $region53
    $region52: #{tpu_custom_call.1} parent=1 // pred_region
      _
    $region53: #{tpu_custom_call.1} parent=1 // pred_fallthru
      _
    // Predicated region
    $region54: #{tpu_custom_call.1} parent=1 // pred_check
      _
    $region55: #{tpu_custom_call.1} parent=1 // pred_check_branch
      %131 = sbr.rel (0) target = $region57
    $region56: #{tpu_custom_call.1} parent=1 // pred_region
      _
    $region57: #{tpu_custom_call.1} parent=1 // pred_fallthru
      _
    // Predicated region
    $region58: #{tpu_custom_call.1} parent=1 // pred_check
      _
    $region59: #{tpu_custom_call.1} parent=1 // pred_check_branch
      %133 = sbr.rel (0) target = $region61
    $region60: #{tpu_custom_call.1} parent=1 // pred_region
      _
    $region61: #{tpu_custom_call.1} parent=1 // pred_fallthru
      _
    // Predicated region
    $region62: #{tpu_custom_call.1} parent=1 // pred_check
      _
    $region63: #{tpu_custom_call.1} parent=1 // pred_check_branch
      %135 = sbr.rel (0) target = $region65
    $region64: #{tpu_custom_call.1} parent=1 // pred_region
      %136 = dma.done [#allocation3], 128
    $region65: #{tpu_custom_call.1} parent=1 // pred_fallthru
      _
    // Predicated region
    $region66: #{tpu_custom_call.1} parent=1 // pred_check
      _
    $region67: #{tpu_custom_call.1} parent=1 // pred_check_branch
      %138 = sbr.rel (0) target = $region69
    $region68: #{tpu_custom_call.1} parent=1 // pred_region
      %139 = dma.done [#allocation6], 256
    $region69: #{tpu_custom_call.1} parent=1 // pred_fallthru
      _
    // Predicated region
    $region70: #{tpu_custom_call.1} parent=1 // pred_check
      _
    $region71: #{tpu_custom_call.1} parent=1 // pred_check_branch
      %141 = sbr.rel (0) target = $region73
    $region72: #{tpu_custom_call.1} parent=1 // pred_region
      %142 = dma.done [#allocation6], 1024
    $region73: #{tpu_custom_call.1} parent=1 // pred_fallthru
      _
    // Predicated region
    $region74: #{tpu_custom_call.1} parent=1 // pred_check
      _
    $region75: #{tpu_custom_call.1} parent=1 // pred_check_branch
      %144 = sbr.rel (0) target = $region77
    $region76: #{tpu_custom_call.1} parent=1 // pred_region
      %145 = dma.done [#allocation9], 2048
    $region77: #{tpu_custom_call.1} parent=1 // pred_fallthru
      _
    // Predicated region
    $region78: #{tpu_custom_call.1} parent=1 // pred_check
      _
    $region79: #{tpu_custom_call.1} parent=1 // pred_check_branch
      %147 = sbr.rel (0) target = $region81
    $region80: #{tpu_custom_call.1} parent=1 // pred_region
      %148 = dma.done [#allocation9], 4096
    $region81: #{tpu_custom_call.1} parent=1 // pred_fallthru
      _
    // Predicated region
    $region82: #{tpu_custom_call.1} parent=1 // pred_check
      _
    $region83: #{tpu_custom_call.1} parent=1 // pred_check_branch
      %150 = sbr.rel (0) target = $region85
    $region84: #{tpu_custom_call.1} parent=1 // pred_region
      %151 = dma.done [#allocation12], 2048
    $region85: #{tpu_custom_call.1} parent=1 // pred_fallthru
      _
    // Predicated region
    $region86: #{tpu_custom_call.1} parent=1 // pred_check
      _
    $region87: #{tpu_custom_call.1} parent=1 // pred_check_branch
      %153 = sbr.rel (0) target = $region89
    $region88: #{tpu_custom_call.1} parent=1 // pred_region
      %154 = dma.done [#allocation12], 1024
    $region89: #{tpu_custom_call.1} parent=1 // pred_fallthru
      _
    // Predicated region
    $region90: #{tpu_custom_call.1} parent=1 // pred_check
      _
    $region91: #{tpu_custom_call.1} parent=1 // pred_check_branch
      %156 = sbr.rel (0) target = $region93
    $region92: #{tpu_custom_call.1} parent=1 // pred_region
      %157 = dma.done [#allocation15], 1024
    $region93: #{tpu_custom_call.1} parent=1 // pred_fallthru
      _
    %v159 = vld [vmem:[#allocation2] sm:$0xff]
    %v160 = vpack.c.bf16 %v159, %v159
    %v161 = vld [vmem:[#allocation5] sm:$0xf]
    %v162 = vld [vmem:[#allocation5 + $0x4] sm:$0xf]
    %v163 = vld [vmem:[#allocation5 + $0x8] sm:$0xf]
    %v164 = vld [vmem:[#allocation5 + $0xc] sm:$0xf]
    %v165 = vld [vmem:[%s8] sm:$0x1]
    %v167 = vlaneseq
    %v168 = vshrl.u32 %v167, 7
    %v169 = vsub.s32 0, %v168
    %v170 = vrot.slane %v165, %v169
    %v176 = vunpack.c.l.b16 %v161
    %v177 = vunpack.c.l.b16 %v162
    %v178 = vunpack.c.l.b16 %v163
    %v179 = vunpack.c.l.b16 %v164
    %v180 = vpack.c.b16 %v177, %v176
    %v181 = vpack.c.b16 %v179, %v178
    %vm184 = vcmask 261120
    %v186 = vsel %vm184, %v160, 0
    %188 = vmatprep.subr.bf16.mxu0 0
    %189 = vmatpush1.bf16.msra.mxu0 %v180
    %190 = vmatprep.subr.bf16.mxu0 0
    %191 = vmatpush1.bf16.msra.mxu0 %v181
    %192 = vmatprep.subr.bf16.mxu0 0
    %193 = vmatpush1.bf16.msra.mxu0 0
    %194 = vmatprep.subr.bf16.mxu0 0
    %195 = vmatpush1.bf16.msra.mxu0 0
    %196 = vmatprep.subr.bf16.mxu0 0
    %197 = vmatpush1.bf16.msra.mxu0 0
    %198 = vmatprep.subr.bf16.mxu0 0
    %199 = vmatpush1.bf16.msra.mxu0 0
    %200 = vmatprep.subr.bf16.mxu0 0
    %201 = vmatpush1.bf16.msra.mxu0 0
    %202 = vmatprep.subr.bf16.mxu0 0
    %203 = vmatpush1.bf16.msra.mxu0 0
    %204 = vmatprep.subr.bf16.mxu0 0
    %205 = vmatpush1.bf16.msra.mxu0 0
    %206 = vmatprep.subr.bf16.mxu0 0
    %207 = vmatpush1.bf16.msra.mxu0 0
    %208 = vmatprep.subr.bf16.mxu0 0
    %209 = vmatpush1.bf16.msra.mxu0 0
    %210 = vmatprep.subr.bf16.mxu0 0
    %211 = vmatpush1.bf16.msra.mxu0 0
    %212 = vmatprep.subr.bf16.mxu0 0
    %213 = vmatpush1.bf16.msra.mxu0 0
    %214 = vmatprep.subr.bf16.mxu0 0
    %215 = vmatpush1.bf16.msra.mxu0 0
    %216 = vmatprep.subr.bf16.mxu0 0
    %217 = vmatpush1.bf16.msra.mxu0 0
    %218 = vmatprep.subr.bf16.mxu0 0
    %219 = vmatpush1.bf16.msra.mxu0 0
    %220 = vmatprep.mubr.bf16.mxu0 0
    %221 = vmatmul.mubr.bf16.gmra.mrb[0].mxu0 %v186
    %v222 = vpop.f32.mrb[0].mxu0
    %v223 = vadd.f32 %v170, %v222
    %v224 = vpop.f32.mrb[0].mxu0
    %v225 = vpop.f32.mrb[0].mxu0
    %v226 = vpop.f32.mrb[0].mxu0
    %227 = vdwg.mxu0
    %v228 = vtanh.pop %v223
    %vm229 = vcmp.gt.f32.partialorder %v223, 0.0
    %v230 = vmul.f32 %v228, 0.25
    %v231 = vsel %vm229, %v228, %v230
    %v232 = vpack.c.bf16 %v231, %v231
    %v233 = vld [vmem:[#allocation7] sm:$0xf]
    %v234 = vld [vmem:[#allocation7 + $0x4] sm:$0xf]
    %v235 = vld [vmem:[#allocation7 + $0x8] sm:$0xf]
    %v236 = vld [vmem:[#allocation7 + $0xc] sm:$0xf]
    %v237 = vld [vmem:[#allocation7 + $0x10] sm:$0xf]
    %v238 = vld [vmem:[#allocation7 + $0x14] sm:$0xf]
    %v239 = vld [vmem:[#allocation7 + $0x18] sm:$0xf]
    %v240 = vld [vmem:[#allocation7 + $0x1c] sm:$0xf]
    %v241 = vld [vmem:[#allocation7 + $0x20] sm:$0xf]
    %v242 = vld [vmem:[#allocation7 + $0x24] sm:$0xf]
    %v243 = vld [vmem:[#allocation7 + $0x28] sm:$0xf]
    %v244 = vld [vmem:[#allocation7 + $0x2c] sm:$0xf]
    %v245 = vld [vmem:[#allocation7 + $0x30] sm:$0xf]
    %v246 = vld [vmem:[#allocation7 + $0x34] sm:$0xf]
    %v247 = vld [vmem:[#allocation7 + $0x38] sm:$0xf]
    %v248 = vld [vmem:[#allocation7 + $0x3c] sm:$0xf]
    %v249 = vld [vmem:[%s9] sm:$0x1]
    %v251 = vlaneseq
    %v252 = vshrl.u32 %v251, 7
    %v253 = vsub.s32 0, %v252
    %v254 = vrot.slane %v249, %v253
    %v272 = vunpack.c.l.b16 %v233
    %v273 = vunpack.c.l.b16 %v234
    %v274 = vunpack.c.l.b16 %v235
    %v275 = vunpack.c.l.b16 %v236
    %v276 = vunpack.c.l.b16 %v237
    %v277 = vunpack.c.l.b16 %v238
    %v278 = vunpack.c.l.b16 %v239
    %v279 = vunpack.c.l.b16 %v240
    %v280 = vunpack.c.l.b16 %v241
    %v281 = vunpack.c.l.b16 %v242
    %v282 = vunpack.c.l.b16 %v243
    %v283 = vunpack.c.l.b16 %v244
    %v284 = vunpack.c.l.b16 %v245
    %v285 = vunpack.c.l.b16 %v246
    %v286 = vunpack.c.l.b16 %v247
    %v287 = vunpack.c.l.b16 %v248
    %v288 = vpack.c.b16 %v273, %v272
    %v289 = vpack.c.b16 %v275, %v274
    %v290 = vpack.c.b16 %v277, %v276
    %v291 = vpack.c.b16 %v279, %v278
    %v292 = vpack.c.b16 %v281, %v280
    %v293 = vpack.c.b16 %v283, %v282
    %v294 = vpack.c.b16 %v285, %v284
    %v295 = vpack.c.b16 %v287, %v286
    %304 = vmatprep.subr.bf16.mxu0 0
    %305 = vmatpush1.bf16.msra.mxu0 %v288
    %306 = vmatprep.subr.bf16.mxu0 0
    %307 = vmatpush1.bf16.msra.mxu0 %v289
    %308 = vmatprep.subr.bf16.mxu0 0
    %309 = vmatpush1.bf16.msra.mxu0 %v290
    %310 = vmatprep.subr.bf16.mxu0 0
    %311 = vmatpush1.bf16.msra.mxu0 %v291
    %312 = vmatprep.subr.bf16.mxu0 0
    %313 = vmatpush1.bf16.msra.mxu0 %v292
    %314 = vmatprep.subr.bf16.mxu0 0
    %315 = vmatpush1.bf16.msra.mxu0 %v293
    %316 = vmatprep.subr.bf16.mxu0 0
    %317 = vmatpush1.bf16.msra.mxu0 %v294
    %318 = vmatprep.subr.bf16.mxu0 0
    %319 = vmatpush1.bf16.msra.mxu0 %v295
    %320 = vmatprep.subr.bf16.mxu0 0
    %321 = vmatpush1.bf16.msra.mxu0 0
    %322 = vmatprep.subr.bf16.mxu0 0
    %323 = vmatpush1.bf16.msra.mxu0 0
    %324 = vmatprep.subr.bf16.mxu0 0
    %325 = vmatpush1.bf16.msra.mxu0 0
    %326 = vmatprep.subr.bf16.mxu0 0
    %327 = vmatpush1.bf16.msra.mxu0 0
    %328 = vmatprep.subr.bf16.mxu0 0
    %329 = vmatpush1.bf16.msra.mxu0 0
    %330 = vmatprep.subr.bf16.mxu0 0
    %331 = vmatpush1.bf16.msra.mxu0 0
    %332 = vmatprep.subr.bf16.mxu0 0
    %333 = vmatpush1.bf16.msra.mxu0 0
    %334 = vmatprep.subr.bf16.mxu0 0
    %335 = vmatpush1.bf16.msra.mxu0 0
    %336 = vmatprep.mubr.bf16.mxu0 0
    %337 = vmatmul.mubr.bf16.gmra.mrb[0].mxu0 %v232
    %v338 = vpop.f32.mrb[0].mxu0
    %v339 = vadd.f32 %v254, %v338
    %v340 = vpop.f32.mrb[0].mxu0
    %v341 = vpop.f32.mrb[0].mxu0
    %v342 = vpop.f32.mrb[0].mxu0
    %343 = vdwg.mxu0
    %v344 = vtanh.pop %v339
    %vm345 = vcmp.gt.f32.partialorder %v339, 0.0
    %v346 = vmul.f32 %v344, 0.25
    %v347 = vsel %vm345, %v344, %v346
    %v348 = vpack.c.bf16 %v347, %v347
    %v349 = vld [vmem:[#allocation8] sm:$0xff]
    %v350 = vld [vmem:[#allocation8 + $0x8] sm:$0xff]
    %v351 = vld [vmem:[#allocation8 + $0x10] sm:$0xff]
    %v352 = vld [vmem:[#allocation8 + $0x18] sm:$0xff]
    %v353 = vld [vmem:[#allocation8 + $0x20] sm:$0xff]
    %v354 = vld [vmem:[#allocation8 + $0x28] sm:$0xff]
    %v355 = vld [vmem:[#allocation8 + $0x30] sm:$0xff]
    %v356 = vld [vmem:[#allocation8 + $0x38] sm:$0xff]
    %v357 = vld [vmem:[#allocation8 + $0x40] sm:$0xff]
    %v358 = vld [vmem:[#allocation8 + $0x48] sm:$0xff]
    %v359 = vld [vmem:[#allocation8 + $0x50] sm:$0xff]
    %v360 = vld [vmem:[#allocation8 + $0x58] sm:$0xff]
    %v361 = vld [vmem:[#allocation8 + $0x60] sm:$0xff]
    %v362 = vld [vmem:[#allocation8 + $0x68] sm:$0xff]
    %v363 = vld [vmem:[#allocation8 + $0x70] sm:$0xff]
    %v364 = vld [vmem:[#allocation8 + $0x78] sm:$0xff]
    %v365 = vld [vmem:[%s10] sm:$0x3]
    %v367 = vlaneseq
    %v368 = vshrl.u32 %v367, 7
    %v369 = vsub.s32 0, %v368
    %v370 = vrot.slane %v365, %v369
    %v371 = vlaneseq
    %v372 = vshrl.u32 %v371, 7
    %v373 = vsub.s32 1, %v372
    %v374 = vrot.slane %v365, %v373
    %v393 = vunpack.c.l.b16 %v349
    %v394 = vunpack.c.h.b16 %v349
    %v395 = vunpack.c.l.b16 %v350
    %v396 = vunpack.c.h.b16 %v350
    %v397 = vunpack.c.l.b16 %v351
    %v398 = vunpack.c.h.b16 %v351
    %v399 = vunpack.c.l.b16 %v352
    %v400 = vunpack.c.h.b16 %v352
    %v401 = vunpack.c.l.b16 %v353
    %v402 = vunpack.c.h.b16 %v353
    %v403 = vunpack.c.l.b16 %v354
    %v404 = vunpack.c.h.b16 %v354
    %v405 = vunpack.c.l.b16 %v355
    %v406 = vunpack.c.h.b16 %v355
    %v407 = vunpack.c.l.b16 %v356
    %v408 = vunpack.c.h.b16 %v356
    %v409 = vunpack.c.l.b16 %v357
    %v410 = vunpack.c.h.b16 %v357
    %v411 = vunpack.c.l.b16 %v358
    %v412 = vunpack.c.h.b16 %v358
    %v413 = vunpack.c.l.b16 %v359
    %v414 = vunpack.c.h.b16 %v359
    %v415 = vunpack.c.l.b16 %v360
    %v416 = vunpack.c.h.b16 %v360
    %v417 = vunpack.c.l.b16 %v361
    %v418 = vunpack.c.h.b16 %v361
    %v419 = vunpack.c.l.b16 %v362
    %v420 = vunpack.c.h.b16 %v362
    %v421 = vunpack.c.l.b16 %v363
    %v422 = vunpack.c.h.b16 %v363
    %v423 = vunpack.c.l.b16 %v364
    %v424 = vunpack.c.h.b16 %v364
    %v425 = vpack.c.b16 %v395, %v393
    %v426 = vpack.c.b16 %v396, %v394
    %v427 = vpack.c.b16 %v399, %v397
    %v428 = vpack.c.b16 %v400, %v398
    %v429 = vpack.c.b16 %v403, %v401
    %v430 = vpack.c.b16 %v404, %v402
    %v431 = vpack.c.b16 %v407, %v405
    %v432 = vpack.c.b16 %v408, %v406
    %v433 = vpack.c.b16 %v411, %v409
    %v434 = vpack.c.b16 %v412, %v410
    %v435 = vpack.c.b16 %v415, %v413
    %v436 = vpack.c.b16 %v416, %v414
    %v437 = vpack.c.b16 %v419, %v417
    %v438 = vpack.c.b16 %v420, %v418
    %v439 = vpack.c.b16 %v423, %v421
    %v440 = vpack.c.b16 %v424, %v422
    %457 = vmatprep.subr.bf16.mxu0 %v426
    %458 = vmatpush1.bf16.msra.mxu0 %v425
    %459 = vmatprep.subr.bf16.mxu0 %v428
    %460 = vmatpush1.bf16.msra.mxu0 %v427
    %461 = vmatprep.subr.bf16.mxu0 %v430
    %462 = vmatpush1.bf16.msra.mxu0 %v429
    %463 = vmatprep.subr.bf16.mxu0 %v432
    %464 = vmatpush1.bf16.msra.mxu0 %v431
    %465 = vmatprep.subr.bf16.mxu0 %v434
    %466 = vmatpush1.bf16.msra.mxu0 %v433
    %467 = vmatprep.subr.bf16.mxu0 %v436
    %468 = vmatpush1.bf16.msra.mxu0 %v435
    %469 = vmatprep.subr.bf16.mxu0 %v438
    %470 = vmatpush1.bf16.msra.mxu0 %v437
    %471 = vmatprep.subr.bf16.mxu0 %v440
    %472 = vmatpush1.bf16.msra.mxu0 %v439
    %473 = vmatprep.subr.bf16.mxu0 0
    %474 = vmatpush1.bf16.msra.mxu0 0
    %475 = vmatprep.subr.bf16.mxu0 0
    %476 = vmatpush1.bf16.msra.mxu0 0
    %477 = vmatprep.subr.bf16.mxu0 0
    %478 = vmatpush1.bf16.msra.mxu0 0
    %479 = vmatprep.subr.bf16.mxu0 0
    %480 = vmatpush1.bf16.msra.mxu0 0
    %481 = vmatprep.subr.bf16.mxu0 0
    %482 = vmatpush1.bf16.msra.mxu0 0
    %483 = vmatprep.subr.bf16.mxu0 0
    %484 = vmatpush1.bf16.msra.mxu0 0
    %485 = vmatprep.subr.bf16.mxu0 0
    %486 = vmatpush1.bf16.msra.mxu0 0
    %487 = vmatprep.subr.bf16.mxu0 0
    %488 = vmatpush1.bf16.msra.mxu0 0
    %489 = vmatprep.mubr.bf16.mxu0 0
    %490 = vmatmul.mubr.bf16.gmra.mrb[0].mxu0 %v348
    %v491 = vpop.f32.mrb[0].mxu0
    %v492 = vadd.f32 %v370, %v491
    %v493 = vpop.f32.mrb[0].mxu0
    %v494 = vadd.f32 %v374, %v493
    %v495 = vpop.f32.mrb[0].mxu0
    %v496 = vpop.f32.mrb[0].mxu0
    %497 = vdwg.mxu0
    %v498 = vtanh.pop %v492
    %v499 = vtanh.pop %v494
    %vm500 = vcmp.gt.f32.partialorder %v492, 0.0
    %vm501 = vcmp.gt.f32.partialorder %v494, 0.0
    %v502 = vmul.f32 %v498, 0.25
    %v503 = vmul.f32 %v499, 0.25
    %v504 = vsel %vm500, %v498, %v502
    %v505 = vsel %vm501, %v499, %v503
    %v506 = vpack.c.bf16 %v504, %v504
    %v507 = vpack.c.bf16 %v505, %v505
    %v508 = vld [vmem:[#allocation10] sm:$0xff]
    %v509 = vld [vmem:[#allocation10 + $0x8] sm:$0xff]
    %v510 = vld [vmem:[#allocation10 + $0x10] sm:$0xff]
    %v511 = vld [vmem:[#allocation10 + $0x18] sm:$0xff]
    %v512 = vld [vmem:[#allocation10 + $0x20] sm:$0xff]
    %v513 = vld [vmem:[#allocation10 + $0x28] sm:$0xff]
    %v514 = vld [vmem:[#allocation10 + $0x30] sm:$0xff]
    %v515 = vld [vmem:[#allocation10 + $0x38] sm:$0xff]
    %v516 = vld [vmem:[#allocation10 + $0x40] sm:$0xff]
    %v517 = vld [vmem:[#allocation10 + $0x48] sm:$0xff]
    %v518 = vld [vmem:[#allocation10 + $0x50] sm:$0xff]
    %v519 = vld [vmem:[#allocation10 + $0x58] sm:$0xff]
    %v520 = vld [vmem:[#allocation10 + $0x60] sm:$0xff]
    %v521 = vld [vmem:[#allocation10 + $0x68] sm:$0xff]
    %v522 = vld [vmem:[#allocation10 + $0x70] sm:$0xff]
    %v523 = vld [vmem:[#allocation10 + $0x78] sm:$0xff]
    %v524 = vld [vmem:[#allocation10 + $0x80] sm:$0xff]
    %v525 = vld [vmem:[#allocation10 + $0x88] sm:$0xff]
    %v526 = vld [vmem:[#allocation10 + $0x90] sm:$0xff]
    %v527 = vld [vmem:[#allocation10 + $0x98] sm:$0xff]
    %v528 = vld [vmem:[#allocation10 + $0xa0] sm:$0xff]
    %v529 = vld [vmem:[#allocation10 + $0xa8] sm:$0xff]
    %v530 = vld [vmem:[#allocation10 + $0xb0] sm:$0xff]
    %v531 = vld [vmem:[#allocation10 + $0xb8] sm:$0xff]
    %v532 = vld [vmem:[#allocation10 + $0xc0] sm:$0xff]
    %v533 = vld [vmem:[#allocation10 + $0xc8] sm:$0xff]
    %v534 = vld [vmem:[#allocation10 + $0xd0] sm:$0xff]
    %v535 = vld [vmem:[#allocation10 + $0xd8] sm:$0xff]
    %v536 = vld [vmem:[#allocation10 + $0xe0] sm:$0xff]
    %v537 = vld [vmem:[#allocation10 + $0xe8] sm:$0xff]
    %v538 = vld [vmem:[#allocation10 + $0xf0] sm:$0xff]
    %v539 = vld [vmem:[#allocation10 + $0xf8] sm:$0xff]
    %v540 = vld [vmem:[%s11] sm:$0x3]
    %v542 = vlaneseq
    %v543 = vshrl.u32 %v542, 7
    %v544 = vsub.s32 0, %v543
    %v545 = vrot.slane %v540, %v544
    %v546 = vlaneseq
    %v547 = vshrl.u32 %v546, 7
    %v548 = vsub.s32 1, %v547
    %v549 = vrot.slane %v540, %v548
    %v584 = vunpack.c.l.b16 %v508
    %v585 = vunpack.c.h.b16 %v508
    %v586 = vunpack.c.l.b16 %v509
    %v587 = vunpack.c.h.b16 %v509
    %v588 = vunpack.c.l.b16 %v510
    %v589 = vunpack.c.h.b16 %v510
    %v590 = vunpack.c.l.b16 %v511
    %v591 = vunpack.c.h.b16 %v511
    %v592 = vunpack.c.l.b16 %v512
    %v593 = vunpack.c.h.b16 %v512
    %v594 = vunpack.c.l.b16 %v513
    %v595 = vunpack.c.h.b16 %v513
    %v596 = vunpack.c.l.b16 %v514
    %v597 = vunpack.c.h.b16 %v514
    %v598 = vunpack.c.l.b16 %v515
    %v599 = vunpack.c.h.b16 %v515
    %v600 = vunpack.c.l.b16 %v516
    %v601 = vunpack.c.h.b16 %v516
    %v602 = vunpack.c.l.b16 %v517
    %v603 = vunpack.c.h.b16 %v517
    %v604 = vunpack.c.l.b16 %v518
    %v605 = vunpack.c.h.b16 %v518
    %v606 = vunpack.c.l.b16 %v519
    %v607 = vunpack.c.h.b16 %v519
    %v608 = vunpack.c.l.b16 %v520
    %v609 = vunpack.c.h.b16 %v520
    %v610 = vunpack.c.l.b16 %v521
    %v611 = vunpack.c.h.b16 %v521
    %v612 = vunpack.c.l.b16 %v522
    %v613 = vunpack.c.h.b16 %v522
    %v614 = vunpack.c.l.b16 %v523
    %v615 = vunpack.c.h.b16 %v523
    %v616 = vunpack.c.l.b16 %v524
    %v617 = vunpack.c.h.b16 %v524
    %v618 = vunpack.c.l.b16 %v525
    %v619 = vunpack.c.h.b16 %v525
    %v620 = vunpack.c.l.b16 %v526
    %v621 = vunpack.c.h.b16 %v526
    %v622 = vunpack.c.l.b16 %v527
    %v623 = vunpack.c.h.b16 %v527
    %v624 = vunpack.c.l.b16 %v528
    %v625 = vunpack.c.h.b16 %v528
    %v626 = vunpack.c.l.b16 %v529
    %v627 = vunpack.c.h.b16 %v529
    %v628 = vunpack.c.l.b16 %v530
    %v629 = vunpack.c.h.b16 %v530
    %v630 = vunpack.c.l.b16 %v531
    %v631 = vunpack.c.h.b16 %v531
    %v632 = vunpack.c.l.b16 %v532
    %v633 = vunpack.c.h.b16 %v532
    %v634 = vunpack.c.l.b16 %v533
    %v635 = vunpack.c.h.b16 %v533
    %v636 = vunpack.c.l.b16 %v534
    %v637 = vunpack.c.h.b16 %v534
    %v638 = vunpack.c.l.b16 %v535
    %v639 = vunpack.c.h.b16 %v535
    %v640 = vunpack.c.l.b16 %v536
    %v641 = vunpack.c.h.b16 %v536
    %v642 = vunpack.c.l.b16 %v537
    %v643 = vunpack.c.h.b16 %v537
    %v644 = vunpack.c.l.b16 %v538
    %v645 = vunpack.c.h.b16 %v538
    %v646 = vunpack.c.l.b16 %v539
    %v647 = vunpack.c.h.b16 %v539
    %v648 = vpack.c.b16 %v586, %v584
    %v649 = vpack.c.b16 %v587, %v585
    %v650 = vpack.c.b16 %v590, %v588
    %v651 = vpack.c.b16 %v591, %v589
    %v652 = vpack.c.b16 %v594, %v592
    %v653 = vpack.c.b16 %v595, %v593
    %v654 = vpack.c.b16 %v598, %v596
    %v655 = vpack.c.b16 %v599, %v597
    %v656 = vpack.c.b16 %v602, %v600
    %v657 = vpack.c.b16 %v603, %v601
    %v658 = vpack.c.b16 %v606, %v604
    %v659 = vpack.c.b16 %v607, %v605
    %v660 = vpack.c.b16 %v610, %v608
    %v661 = vpack.c.b16 %v611, %v609
    %v662 = vpack.c.b16 %v614, %v612
    %v663 = vpack.c.b16 %v615, %v613
    %v664 = vpack.c.b16 %v618, %v616
    %v665 = vpack.c.b16 %v619, %v617
    %v666 = vpack.c.b16 %v622, %v620
    %v667 = vpack.c.b16 %v623, %v621
    %v668 = vpack.c.b16 %v626, %v624
    %v669 = vpack.c.b16 %v627, %v625
    %v670 = vpack.c.b16 %v630, %v628
    %v671 = vpack.c.b16 %v631, %v629
    %v672 = vpack.c.b16 %v634, %v632
    %v673 = vpack.c.b16 %v635, %v633
    %v674 = vpack.c.b16 %v638, %v636
    %v675 = vpack.c.b16 %v639, %v637
    %v676 = vpack.c.b16 %v642, %v640
    %v677 = vpack.c.b16 %v643, %v641
    %v678 = vpack.c.b16 %v646, %v644
    %v679 = vpack.c.b16 %v647, %v645
    %712 = vmatprep.subr.bf16.mxu0 %v649
    %713 = vmatpush1.bf16.msra.mxu0 %v648
    %714 = vmatprep.subr.bf16.mxu0 %v651
    %715 = vmatpush1.bf16.msra.mxu0 %v650
    %716 = vmatprep.subr.bf16.mxu0 %v653
    %717 = vmatpush1.bf16.msra.mxu0 %v652
    %718 = vmatprep.subr.bf16.mxu0 %v655
    %719 = vmatpush1.bf16.msra.mxu0 %v654
    %720 = vmatprep.subr.bf16.mxu0 %v657
    %721 = vmatpush1.bf16.msra.mxu0 %v656
    %722 = vmatprep.subr.bf16.mxu0 %v659
    %723 = vmatpush1.bf16.msra.mxu0 %v658
    %724 = vmatprep.subr.bf16.mxu0 %v661
    %725 = vmatpush1.bf16.msra.mxu0 %v660
    %726 = vmatprep.subr.bf16.mxu0 %v663
    %727 = vmatpush1.bf16.msra.mxu0 %v662
    %728 = vmatprep.subr.bf16.mxu0 %v665
    %729 = vmatpush1.bf16.msra.mxu0 %v664
    %730 = vmatprep.subr.bf16.mxu0 %v667
    %731 = vmatpush1.bf16.msra.mxu0 %v666
    %732 = vmatprep.subr.bf16.mxu0 %v669
    %733 = vmatpush1.bf16.msra.mxu0 %v668
    %734 = vmatprep.subr.bf16.mxu0 %v671
    %735 = vmatpush1.bf16.msra.mxu0 %v670
    %736 = vmatprep.subr.bf16.mxu0 %v673
    %737 = vmatpush1.bf16.msra.mxu0 %v672
    %738 = vmatprep.subr.bf16.mxu0 %v675
    %739 = vmatpush1.bf16.msra.mxu0 %v674
    %740 = vmatprep.subr.bf16.mxu0 %v677
    %741 = vmatpush1.bf16.msra.mxu0 %v676
    %742 = vmatprep.subr.bf16.mxu0 %v679
    %743 = vmatpush1.bf16.msra.mxu0 %v678
    %744 = vmatprep.mubr.bf16.mxu0 %v507
    %745 = vmatmul.mubr.bf16.gmra.mrb[0].mxu0 %v506
    %v746 = vpop.f32.mrb[0].mxu0
    %v747 = vadd.f32 %v545, %v746
    %v748 = vpop.f32.mrb[0].mxu0
    %v749 = vadd.f32 %v549, %v748
    %v750 = vpop.f32.mrb[0].mxu0
    %v751 = vpop.f32.mrb[0].mxu0
    %752 = vdwg.mxu0
    %v753 = vtanh.pop %v747
    %v754 = vtanh.pop %v749
    %vm755 = vcmp.gt.f32.partialorder %v747, 0.0
    %vm756 = vcmp.gt.f32.partialorder %v749, 0.0
    %v757 = vmul.f32 %v753, 0.25
    %v758 = vmul.f32 %v754, 0.25
    %v759 = vsel %vm755, %v753, %v757
    %v760 = vsel %vm756, %v754, %v758
    %v761 = vpack.c.bf16 %v759, %v759
    %v762 = vpack.c.bf16 %v760, %v760
    %v763 = vld [vmem:[#allocation11] sm:$0xf]
    %v764 = vld [vmem:[#allocation11 + $0x4] sm:$0xf]
    %v765 = vld [vmem:[#allocation11 + $0x8] sm:$0xf]
    %v766 = vld [vmem:[#allocation11 + $0xc] sm:$0xf]
    %v767 = vld [vmem:[#allocation11 + $0x10] sm:$0xf]
    %v768 = vld [vmem:[#allocation11 + $0x14] sm:$0xf]
    %v769 = vld [vmem:[#allocation11 + $0x18] sm:$0xf]
    %v770 = vld [vmem:[#allocation11 + $0x1c] sm:$0xf]
    %v771 = vld [vmem:[#allocation11 + $0x20] sm:$0xf]
    %v772 = vld [vmem:[#allocation11 + $0x24] sm:$0xf]
    %v773 = vld [vmem:[#allocation11 + $0x28] sm:$0xf]
    %v774 = vld [vmem:[#allocation11 + $0x2c] sm:$0xf]
    %v775 = vld [vmem:[#allocation11 + $0x30] sm:$0xf]
    %v776 = vld [vmem:[#allocation11 + $0x34] sm:$0xf]
    %v777 = vld [vmem:[#allocation11 + $0x38] sm:$0xf]
    %v778 = vld [vmem:[#allocation11 + $0x3c] sm:$0xf]
    %v779 = vld [vmem:[#allocation11 + $0x40] sm:$0xf]
    %v780 = vld [vmem:[#allocation11 + $0x44] sm:$0xf]
    %v781 = vld [vmem:[#allocation11 + $0x48] sm:$0xf]
    %v782 = vld [vmem:[#allocation11 + $0x4c] sm:$0xf]
    %v783 = vld [vmem:[#allocation11 + $0x50] sm:$0xf]
    %v784 = vld [vmem:[#allocation11 + $0x54] sm:$0xf]
    %v785 = vld [vmem:[#allocation11 + $0x58] sm:$0xf]
    %v786 = vld [vmem:[#allocation11 + $0x5c] sm:$0xf]
    %v787 = vld [vmem:[#allocation11 + $0x60] sm:$0xf]
    %v788 = vld [vmem:[#allocation11 + $0x64] sm:$0xf]
    %v789 = vld [vmem:[#allocation11 + $0x68] sm:$0xf]
    %v790 = vld [vmem:[#allocation11 + $0x6c] sm:$0xf]
    %v791 = vld [vmem:[#allocation11 + $0x70] sm:$0xf]
    %v792 = vld [vmem:[#allocation11 + $0x74] sm:$0xf]
    %v793 = vld [vmem:[#allocation11 + $0x78] sm:$0xf]
    %v794 = vld [vmem:[#allocation11 + $0x7c] sm:$0xf]
    %v795 = vld [vmem:[%s12] sm:$0x1]
    %v797 = vlaneseq
    %v798 = vshrl.u32 %v797, 7
    %v799 = vsub.s32 0, %v798
    %v800 = vrot.slane %v795, %v799
    %v834 = vunpack.c.l.b16 %v763
    %v835 = vunpack.c.l.b16 %v764
    %v836 = vunpack.c.l.b16 %v765
    %v837 = vunpack.c.l.b16 %v766
    %v838 = vunpack.c.l.b16 %v767
    %v839 = vunpack.c.l.b16 %v768
    %v840 = vunpack.c.l.b16 %v769
    %v841 = vunpack.c.l.b16 %v770
    %v842 = vunpack.c.l.b16 %v771
    %v843 = vunpack.c.l.b16 %v772
    %v844 = vunpack.c.l.b16 %v773
    %v845 = vunpack.c.l.b16 %v774
    %v846 = vunpack.c.l.b16 %v775
    %v847 = vunpack.c.l.b16 %v776
    %v848 = vunpack.c.l.b16 %v777
    %v849 = vunpack.c.l.b16 %v778
    %v850 = vunpack.c.l.b16 %v779
    %v851 = vunpack.c.l.b16 %v780
    %v852 = vunpack.c.l.b16 %v781
    %v853 = vunpack.c.l.b16 %v782
    %v854 = vunpack.c.l.b16 %v783
    %v855 = vunpack.c.l.b16 %v784
    %v856 = vunpack.c.l.b16 %v785
    %v857 = vunpack.c.l.b16 %v786
    %v858 = vunpack.c.l.b16 %v787
    %v859 = vunpack.c.l.b16 %v788
    %v860 = vunpack.c.l.b16 %v789
    %v861 = vunpack.c.l.b16 %v790
    %v862 = vunpack.c.l.b16 %v791
    %v863 = vunpack.c.l.b16 %v792
    %v864 = vunpack.c.l.b16 %v793
    %v865 = vunpack.c.l.b16 %v794
    %v866 = vpack.c.b16 %v835, %v834
    %v867 = vpack.c.b16 %v837, %v836
    %v868 = vpack.c.b16 %v839, %v838
    %v869 = vpack.c.b16 %v841, %v840
    %v870 = vpack.c.b16 %v843, %v842
    %v871 = vpack.c.b16 %v845, %v844
    %v872 = vpack.c.b16 %v847, %v846
    %v873 = vpack.c.b16 %v849, %v848
    %v874 = vpack.c.b16 %v851, %v850
    %v875 = vpack.c.b16 %v853, %v852
    %v876 = vpack.c.b16 %v855, %v854
    %v877 = vpack.c.b16 %v857, %v856
    %v878 = vpack.c.b16 %v859, %v858
    %v879 = vpack.c.b16 %v861, %v860
    %v880 = vpack.c.b16 %v863, %v862
    %v881 = vpack.c.b16 %v865, %v864
    %898 = vmatprep.subr.bf16.mxu0 0
    %899 = vmatpush1.bf16.msra.mxu0 %v866
    %900 = vmatprep.subr.bf16.mxu0 0
    %901 = vmatpush1.bf16.msra.mxu0 %v867
    %902 = vmatprep.subr.bf16.mxu0 0
    %903 = vmatpush1.bf16.msra.mxu0 %v868
    %904 = vmatprep.subr.bf16.mxu0 0
    %905 = vmatpush1.bf16.msra.mxu0 %v869
    %906 = vmatprep.subr.bf16.mxu0 0
    %907 = vmatpush1.bf16.msra.mxu0 %v870
    %908 = vmatprep.subr.bf16.mxu0 0
    %909 = vmatpush1.bf16.msra.mxu0 %v871
    %910 = vmatprep.subr.bf16.mxu0 0
    %911 = vmatpush1.bf16.msra.mxu0 %v872
    %912 = vmatprep.subr.bf16.mxu0 0
    %913 = vmatpush1.bf16.msra.mxu0 %v873
    %914 = vmatprep.subr.bf16.mxu0 0
    %915 = vmatpush1.bf16.msra.mxu0 %v874
    %916 = vmatprep.subr.bf16.mxu0 0
    %917 = vmatpush1.bf16.msra.mxu0 %v875
    %918 = vmatprep.subr.bf16.mxu0 0
    %919 = vmatpush1.bf16.msra.mxu0 %v876
    %920 = vmatprep.subr.bf16.mxu0 0
    %921 = vmatpush1.bf16.msra.mxu0 %v877
    %922 = vmatprep.subr.bf16.mxu0 0
    %923 = vmatpush1.bf16.msra.mxu0 %v878
    %924 = vmatprep.subr.bf16.mxu0 0
    %925 = vmatpush1.bf16.msra.mxu0 %v879
    %926 = vmatprep.subr.bf16.mxu0 0
    %927 = vmatpush1.bf16.msra.mxu0 %v880
    %928 = vmatprep.subr.bf16.mxu0 0
    %929 = vmatpush1.bf16.msra.mxu0 %v881
    %930 = vmatprep.mubr.bf16.mxu0 %v762
    %931 = vmatmul.mubr.bf16.gmra.mrb[0].mxu0 %v761
    %v932 = vpop.f32.mrb[0].mxu0
    %v933 = vadd.f32 %v800, %v932
    %v934 = vpop.f32.mrb[0].mxu0
    %v935 = vpop.f32.mrb[0].mxu0
    %v936 = vpop.f32.mrb[0].mxu0
    %937 = vdwg.mxu0
    %v938 = vtanh.pop %v933
    %vm939 = vcmp.gt.f32.partialorder %v933, 0.0
    %v940 = vmul.f32 %v938, 0.25
    %v941 = vsel %vm939, %v938, %v940
    %v942 = vpack.c.bf16 %v941, %v941
    %v943 = vld [vmem:[#allocation13] sm:$0xf]
    %v944 = vld [vmem:[#allocation13 + $0x4] sm:$0xf]
    %v945 = vld [vmem:[#allocation13 + $0x8] sm:$0xf]
    %v946 = vld [vmem:[#allocation13 + $0xc] sm:$0xf]
    %v947 = vld [vmem:[#allocation13 + $0x10] sm:$0xf]
    %v948 = vld [vmem:[#allocation13 + $0x14] sm:$0xf]
    %v949 = vld [vmem:[#allocation13 + $0x18] sm:$0xf]
    %v950 = vld [vmem:[#allocation13 + $0x1c] sm:$0xf]
    %v951 = vld [vmem:[#allocation13 + $0x20] sm:$0xf]
    %v952 = vld [vmem:[#allocation13 + $0x24] sm:$0xf]
    %v953 = vld [vmem:[#allocation13 + $0x28] sm:$0xf]
    %v954 = vld [vmem:[#allocation13 + $0x2c] sm:$0xf]
    %v955 = vld [vmem:[#allocation13 + $0x30] sm:$0xf]
    %v956 = vld [vmem:[#allocation13 + $0x34] sm:$0xf]
    %v957 = vld [vmem:[#allocation13 + $0x38] sm:$0xf]
    %v958 = vld [vmem:[#allocation13 + $0x3c] sm:$0xf]
    %v959 = vld [vmem:[%s13] sm:$0x1]
    %v961 = vlaneseq
    %v962 = vshrl.u32 %v961, 7
    %v963 = vsub.s32 0, %v962
    %v964 = vrot.slane %v959, %v963
    %v982 = vunpack.c.l.b16 %v943
    %v983 = vunpack.c.l.b16 %v944
    %v984 = vunpack.c.l.b16 %v945
    %v985 = vunpack.c.l.b16 %v946
    %v986 = vunpack.c.l.b16 %v947
    %v987 = vunpack.c.l.b16 %v948
    %v988 = vunpack.c.l.b16 %v949
    %v989 = vunpack.c.l.b16 %v950
    %v990 = vunpack.c.l.b16 %v951
    %v991 = vunpack.c.l.b16 %v952
    %v992 = vunpack.c.l.b16 %v953
    %v993 = vunpack.c.l.b16 %v954
    %v994 = vunpack.c.l.b16 %v955
    %v995 = vunpack.c.l.b16 %v956
    %v996 = vunpack.c.l.b16 %v957
    %v997 = vunpack.c.l.b16 %v958
    %v998 = vpack.c.b16 %v983, %v982
    %v999 = vpack.c.b16 %v985, %v984
    %v1000 = vpack.c.b16 %v987, %v986
    %v1001 = vpack.c.b16 %v989, %v988
    %v1002 = vpack.c.b16 %v991, %v990
    %v1003 = vpack.c.b16 %v993, %v992
    %v1004 = vpack.c.b16 %v995, %v994
    %v1005 = vpack.c.b16 %v997, %v996
    %1014 = vmatprep.subr.bf16.mxu0 0
    %1015 = vmatpush1.bf16.msra.mxu0 %v998
    %1016 = vmatprep.subr.bf16.mxu0 0
    %1017 = vmatpush1.bf16.msra.mxu0 %v999
    %1018 = vmatprep.subr.bf16.mxu0 0
    %1019 = vmatpush1.bf16.msra.mxu0 %v1000
    %1020 = vmatprep.subr.bf16.mxu0 0
    %1021 = vmatpush1.bf16.msra.mxu0 %v1001
    %1022 = vmatprep.subr.bf16.mxu0 0
    %1023 = vmatpush1.bf16.msra.mxu0 %v1002
    %1024 = vmatprep.subr.bf16.mxu0 0
    %1025 = vmatpush1.bf16.msra.mxu0 %v1003
    %1026 = vmatprep.subr.bf16.mxu0 0
    %1027 = vmatpush1.bf16.msra.mxu0 %v1004
    %1028 = vmatprep.subr.bf16.mxu0 0
    %1029 = vmatpush1.bf16.msra.mxu0 %v1005
    %1030 = vmatprep.subr.bf16.mxu0 0
    %1031 = vmatpush1.bf16.msra.mxu0 0
    %1032 = vmatprep.subr.bf16.mxu0 0
    %1033 = vmatpush1.bf16.msra.mxu0 0
    %1034 = vmatprep.subr.bf16.mxu0 0
    %1035 = vmatpush1.bf16.msra.mxu0 0
    %1036 = vmatprep.subr.bf16.mxu0 0
    %1037 = vmatpush1.bf16.msra.mxu0 0
    %1038 = vmatprep.subr.bf16.mxu0 0
    %1039 = vmatpush1.bf16.msra.mxu0 0
    %1040 = vmatprep.subr.bf16.mxu0 0
    %1041 = vmatpush1.bf16.msra.mxu0 0
    %1042 = vmatprep.subr.bf16.mxu0 0
    %1043 = vmatpush1.bf16.msra.mxu0 0
    %1044 = vmatprep.subr.bf16.mxu0 0
    %1045 = vmatpush1.bf16.msra.mxu0 0
    %1046 = vmatprep.mubr.bf16.mxu0 0
    %1047 = vmatmul.mubr.bf16.gmra.mrb[0].mxu0 %v942
    %v1048 = vpop.f32.mrb[0].mxu0
    %v1049 = vadd.f32 %v964, %v1048
    %v1050 = vpop.f32.mrb[0].mxu0
    %v1051 = vpop.f32.mrb[0].mxu0
    %v1052 = vpop.f32.mrb[0].mxu0
    %1053 = vdwg.mxu0
    %v1054 = vtanh.pop %v1049
    %vm1055 = vcmp.gt.f32.partialorder %v1049, 0.0
    %v1056 = vmul.f32 %v1054, 0.25
    %v1057 = vsel %vm1055, %v1054, %v1056
    %v1058 = vpack.c.bf16 %v1057, %v1057
    %v1059 = vld [vmem:[#allocation14] sm:$0xf]
    %v1060 = vld [vmem:[#allocation14 + $0x4] sm:$0xf]
    %v1061 = vld [vmem:[#allocation14 + $0x8] sm:$0xf]
    %v1062 = vld [vmem:[#allocation14 + $0xc] sm:$0xf]
    %v1063 = vld [vmem:[#allocation14 + $0x10] sm:$0xf]
    %v1064 = vld [vmem:[#allocation14 + $0x14] sm:$0xf]
    %v1065 = vld [vmem:[#allocation14 + $0x18] sm:$0xf]
    %v1066 = vld [vmem:[#allocation14 + $0x1c] sm:$0xf]
    %v1067 = vld [vmem:[#allocation14 + $0x20] sm:$0xf]
    %v1068 = vld [vmem:[#allocation14 + $0x24] sm:$0xf]
    %v1069 = vld [vmem:[#allocation14 + $0x28] sm:$0xf]
    %v1070 = vld [vmem:[#allocation14 + $0x2c] sm:$0xf]
    %v1071 = vld [vmem:[#allocation14 + $0x30] sm:$0xf]
    %v1072 = vld [vmem:[#allocation14 + $0x34] sm:$0xf]
    %v1073 = vld [vmem:[#allocation14 + $0x38] sm:$0xf]
    %v1074 = vld [vmem:[#allocation14 + $0x3c] sm:$0xf]
    %v1075 = vld [vmem:[%s14] sm:$0x1]
    %v1077 = vlaneseq
    %v1078 = vshrl.u32 %v1077, 7
    %v1079 = vsub.s32 0, %v1078
    %v1080 = vrot.slane %v1075, %v1079
    %v1098 = vunpack.c.l.b16 %v1059
    %v1099 = vunpack.c.l.b16 %v1060
    %v1100 = vunpack.c.l.b16 %v1061
    %v1101 = vunpack.c.l.b16 %v1062
    %v1102 = vunpack.c.l.b16 %v1063
    %v1103 = vunpack.c.l.b16 %v1064
    %v1104 = vunpack.c.l.b16 %v1065
    %v1105 = vunpack.c.l.b16 %v1066
    %v1106 = vunpack.c.l.b16 %v1067
    %v1107 = vunpack.c.l.b16 %v1068
    %v1108 = vunpack.c.l.b16 %v1069
    %v1109 = vunpack.c.l.b16 %v1070
    %v1110 = vunpack.c.l.b16 %v1071
    %v1111 = vunpack.c.l.b16 %v1072
    %v1112 = vunpack.c.l.b16 %v1073
    %v1113 = vunpack.c.l.b16 %v1074
    %v1114 = vpack.c.b16 %v1099, %v1098
    %v1115 = vpack.c.b16 %v1101, %v1100
    %v1116 = vpack.c.b16 %v1103, %v1102
    %v1117 = vpack.c.b16 %v1105, %v1104
    %v1118 = vpack.c.b16 %v1107, %v1106
    %v1119 = vpack.c.b16 %v1109, %v1108
    %v1120 = vpack.c.b16 %v1111, %v1110
    %v1121 = vpack.c.b16 %v1113, %v1112
    %1130 = vmatprep.subr.bf16.mxu0 0
    %1131 = vmatpush1.bf16.msra.mxu0 %v1114
    %1132 = vmatprep.subr.bf16.mxu0 0
    %1133 = vmatpush1.bf16.msra.mxu0 %v1115
    %1134 = vmatprep.subr.bf16.mxu0 0
    %1135 = vmatpush1.bf16.msra.mxu0 %v1116
    %1136 = vmatprep.subr.bf16.mxu0 0
    %1137 = vmatpush1.bf16.msra.mxu0 %v1117
    %1138 = vmatprep.subr.bf16.mxu0 0
    %1139 = vmatpush1.bf16.msra.mxu0 %v1118
    %1140 = vmatprep.subr.bf16.mxu0 0
    %1141 = vmatpush1.bf16.msra.mxu0 %v1119
    %1142 = vmatprep.subr.bf16.mxu0 0
    %1143 = vmatpush1.bf16.msra.mxu0 %v1120
    %1144 = vmatprep.subr.bf16.mxu0 0
    %1145 = vmatpush1.bf16.msra.mxu0 %v1121
    %1146 = vmatprep.subr.bf16.mxu0 0
    %1147 = vmatpush1.bf16.msra.mxu0 0
    %1148 = vmatprep.subr.bf16.mxu0 0
    %1149 = vmatpush1.bf16.msra.mxu0 0
    %1150 = vmatprep.subr.bf16.mxu0 0
    %1151 = vmatpush1.bf16.msra.mxu0 0
    %1152 = vmatprep.subr.bf16.mxu0 0
    %1153 = vmatpush1.bf16.msra.mxu0 0
    %1154 = vmatprep.subr.bf16.mxu0 0
    %1155 = vmatpush1.bf16.msra.mxu0 0
    %1156 = vmatprep.subr.bf16.mxu0 0
    %1157 = vmatpush1.bf16.msra.mxu0 0
    %1158 = vmatprep.subr.bf16.mxu0 0
    %1159 = vmatpush1.bf16.msra.mxu0 0
    %1160 = vmatprep.subr.bf16.mxu0 0
    %1161 = vmatpush1.bf16.msra.mxu0 0
    %1162 = vmatprep.mubr.bf16.mxu0 0
    %1163 = vmatmul.mubr.bf16.gmra.mrb[0].mxu0 %v1058
    %v1164 = vpop.f32.mrb[0].mxu0
    %v1165 = vadd.f32 %v1080, %v1164
    %v1166 = vpop.f32.mrb[0].mxu0
    %v1167 = vpop.f32.mrb[0].mxu0
    %v1168 = vpop.f32.mrb[0].mxu0
    %1169 = vdwg.mxu0
    %1170 = vst [vmem:[#allocation16] sm:$0xff] %v1165
    // Predicated region
    $region94: #{tpu_custom_call.1} parent=1 // pred_check
      _
    $region95: #{tpu_custom_call.1} parent=1 // pred_check_branch
      %1172 = sbr.rel (0) target = $region97
    $region96: #{tpu_custom_call.1} parent=1 // pred_region
      %s1174 = ssub.s32 128, 128
      %1175 = vsyncadd [#allocation4], %s1174
      %s1177 = sshll.u32 [#allocation16], 4
      %s1178 = int_to_ptr.vmem [resolvable:$true] %s1177
      %1180 = dma.vmem_to_hbm [thread:$0]  %s1178, 128, %s15, [#allocation4]
    $region97: #{tpu_custom_call.1} parent=1 // pred_fallthru
      _
    // Predicated region
    $region98: #{tpu_custom_call.1} parent=1 // pred_check
      _
    $region99: #{tpu_custom_call.1} parent=1 // pred_check_branch
      %1182 = sbr.rel (0) target = $region101
    $region100: #{tpu_custom_call.1} parent=1 // pred_region
      %1183 = dma.done [#allocation4], 128
    $region101: #{tpu_custom_call.1} parent=1 // pred_fallthru
      _
    %1184 = vsyncpa [#allocation3], 1
    %1185 = vsyncpa [#allocation6], 1
    %1186 = vsyncpa [#allocation9], 1
    %1187 = vsyncpa [#allocation12], 1
    %1188 = vsyncpa [#allocation15], 1
    %1189 = vsyncpa [#allocation4], 1

</llo_original>
